<compile_context>
chip_gen: v7x
topology: tpu7x:2x2x1
jax: 0.10.0
libtpu: 0.0.40
codegen_flags: <defaults>
</compile_context>

<pallas_src>
import functools

import jax
import jax.numpy as jnp
from jax import lax
from jax.experimental import pallas as pl
from jax.experimental.pallas import tpu as pltpu


def _round_up(a, m):
    return (a + m - 1) // m * m


def _conv1d_kernel(x_ref, w_ref, b_ref, o_ref, acc_ref, *, K, stride, dilation, TT):
    """One (batch, time-tile, cout-tile) grid point.

    x_ref  : (1, 1, TT_in, Ci_p)  time tile with halo, channels padded
    w_ref  : (K, Ci_p, TCo)       weight taps
    b_ref  : (1, TCo)             f32 bias slice
    o_ref  : (1, TT, TCo)         output tile (lane-dense, TCo % 128 == 0)
    acc_ref: VMEM (TT, TCo) f32   accumulator scratch
    """
    # Fold the bias into the accumulator init (no separate full-tile VPU add).
    acc_ref[...] = jnp.broadcast_to(b_ref[...].astype(jnp.float32), acc_ref.shape)

    # Static unrolled loop over the K taps -> K MXU matmuls, f32 accumulate.
    for k in range(K):
        start = k * dilation
        if stride == 1:
            xs = x_ref[0, 0, pl.ds(start, TT), :]
        else:
            # TODO(synk): for stride > 1 a wrapper-side stride-folded layout
            # would avoid strided sublane loads; this path is correctness-only.
            xs = x_ref[0, 0, pl.ds(start, TT, stride=stride), :]
        acc_ref[...] += jnp.dot(xs, w_ref[k], preferred_element_type=jnp.float32)

    o_ref[0] = acc_ref[...].astype(o_ref.dtype)


def conv_forward(x, weight, bias=None, *, stride=1, padding=0, dilation=1,
                 compute_dtype=None, time_tile=None):
    """Equivalent of Conv.forward(x) with x of shape (B, T, C_in).

    weight: (C_out, C_in, K)  -- PyTorch Conv1d layout
    bias  : (C_out,) or None
    compute_dtype: optional dtype (e.g. jnp.bfloat16) for MXU inputs;
                   accumulation is always f32.
    returns (B, T_out, C_out) in x.dtype
    """
    B, T, C_in = x.shape
    C_out, C_in_w, K = weight.shape
    assert C_in == C_in_w, (C_in, C_in_w)

    out_dtype = x.dtype
    cdt = jnp.dtype(compute_dtype) if compute_dtype is not None else jnp.dtype(x.dtype)
    cdt_size = cdt.itemsize
    out_size = jnp.dtype(out_dtype).itemsize

    T_pad = T + 2 * padding
    T_out = (T_pad - dilation * (K - 1) - 1) // stride + 1
    assert T_out >= 1, "output length must be positive"

    # --- lane-dense channel padding (masked stores at C_out<128 are ~4.5x slower)
    Ci_p = _round_up(C_in, 128)
    Co_p = _round_up(C_out, 128)
    TCo = 256 if (Co_p % 256 == 0) else 128     # C_out tile width
    n_co = Co_p // TCo

    # --- choose the time tile from a conservative VMEM budget (safe on v7x's
    #     64 MiB physical / 32 MiB scoped VMEM as well as v5e/v6e).
    budget = 12 * 1024 * 1024
    w_bytes = 2 * K * Ci_p * TCo * cdt_size     # weight block (double-buffered)

    def vmem_est(tt):
        tt_in = (tt - 1) * stride + dilation * (K - 1) + 1
        return (2 * tt_in * Ci_p * cdt_size     # double-buffered x tile
                + 2 * tt * TCo * out_size       # double-buffered out tile
                + tt * TCo * 4                  # f32 accumulator scratch
                + w_bytes)

    T_out8 = _round_up(T_out, 8)
    if time_tile is not None:
        TT = time_tile
    else:
        TT = 8
        for cand in (1024, 768, 512, 384, 256, 128, 64, 32, 16, 8):
            if cand <= T_out8 and vmem_est(cand) <= budget:
                TT = cand
                break

    nt = (T_out + TT - 1) // TT
    TT_in = (TT - 1) * stride + dilation * (K - 1) + 1
    needed_len = (nt * TT - 1) * stride + dilation * (K - 1) + 1
    pad_right = max(padding, needed_len - T - padding)

    # --- glue in plain JAX: conv zero-padding + channel padding + halo tiles
    x_full = jnp.pad(x, ((0, 0), (padding, pad_right), (0, Ci_p - C_in)))
    x_full = x_full.astype(cdt)
    starts = jnp.arange(nt, dtype=jnp.int32) * (TT * stride)
    idx = starts[:, None] + jnp.arange(TT_in, dtype=jnp.int32)[None, :]
    x_tiles = x_full[:, idx, :]                              # (B, nt, TT_in, Ci_p)

    w = jnp.transpose(weight, (2, 1, 0))                     # (K, C_in, C_out)
    w = jnp.pad(w, ((0, 0), (0, Ci_p - C_in), (0, Co_p - C_out))).astype(cdt)
    if bias is None:
        b = jnp.zeros((1, Co_p), jnp.float32)
    else:
        b = jnp.pad(bias.astype(jnp.float32), (0, Co_p - C_out)).reshape(1, Co_p)

    kernel = functools.partial(_conv1d_kernel, K=K, stride=stride,
                               dilation=dilation, TT=TT)

    cost = pl.CostEstimate(
        flops=2 * B * T_out * K * C_in * C_out,
        transcendentals=0,
        bytes_accessed=(B * T * C_in * x.dtype.itemsize
                        + C_out * C_in * K * weight.dtype.itemsize
                        + B * T_out * C_out * out_size),
    )

    # NOTE: the weight/bias BlockSpecs have constant (or cout-only) index maps;
    # pipeline_mode=pl.Buffered(1) would save their second VMEM buffer.
    out = pl.pallas_call(
        kernel,
        out_shape=jax.ShapeDtypeStruct((B, nt * TT, Co_p), out_dtype),
        grid_spec=pltpu.PrefetchScalarGridSpec(
            num_scalar_prefetch=0,
            grid=(B, nt, n_co),
            in_specs=[
                pl.BlockSpec((1, 1, TT_in, Ci_p), lambda b_, i, j: (b_, i, 0, 0)),
                pl.BlockSpec((K, Ci_p, TCo), lambda b_, i, j: (0, 0, j)),
                pl.BlockSpec((1, TCo), lambda b_, i, j: (0, j)),
            ],
            out_specs=pl.BlockSpec((1, TT, TCo), lambda b_, i, j: (b_, i, j)),
            scratch_shapes=[pltpu.VMEM((TT, TCo), jnp.float32)],
        ),
        compiler_params=pltpu.CompilerParams(
            dimension_semantics=("parallel", "parallel", "parallel"),
            vmem_limit_bytes=48 * 1024 * 1024,
        ),
        cost_estimate=cost,
    )(x_tiles, w, b)

    return out[:, :T_out, :C_out]


def _reference(x, weight, bias, *, stride, padding, dilation):
    # pure-JAX reference matching torch.nn.Conv1d on NCW, with the module's
    # surrounding transposes folded in (input/output are (B, T, C)).
    x_ncw = jnp.transpose(x, (0, 2, 1))  # (B, C_in, T)
    y = lax.conv_general_dilated(
        x_ncw,
        weight,  # (C_out, C_in, K)
        window_strides=(stride,),
        padding=[(padding, padding)],
        rhs_dilation=(dilation,),
        dimension_numbers=("NCH", "OIH", "NCH"),
    )
    y = y + bias[None, :, None]
    return jnp.transpose(y, (0, 2, 1))  # (B, T_out, C_out)


if __name__ == "__main__":
    key = jax.random.PRNGKey(0)
    kx, kw, kb, kx2, kw2, kb2 = jax.random.split(key, 6)

    def make_params(kw_, kb_, c_in, c_out, k):
        fan_in = c_in * k
        fan_out = c_out * k
        limit = (6.0 / (fan_in + fan_out)) ** 0.5
        w_ = jax.random.uniform(kw_, (c_out, c_in, k), jnp.float32, -limit, limit)
        b_ = jax.random.uniform(kb_, (c_out,), jnp.float32, -0.1, 0.1)
        return w_, b_

    # ---- config A: Conv(8, 16, kernel_size=3, padding=1), f32 path ----
    B, T, C_in, C_out, K = 2, 16, 8, 16, 3
    x = jax.random.normal(kx, (B, T, C_in), jnp.float32)
    w, b = make_params(kw, kb, C_in, C_out, K)

    out = jax.block_until_ready(
        conv_forward(x, w, b, stride=1, padding=1, dilation=1))
    ref = _reference(x, w, b, stride=1, padding=1, dilation=1)
    assert out.shape == ref.shape, (out.shape, ref.shape)
    assert jnp.allclose(out, ref, atol=1e-5, rtol=1e-5), float(
        jnp.max(jnp.abs(out - ref)))

    # ---- config A, bf16 MXU inputs (f32 accumulate) ----
    out_bf = jax.block_until_ready(
        conv_forward(x, w, b, stride=1, padding=1, dilation=1,
                     compute_dtype=jnp.bfloat16))
    x_r = x.astype(jnp.bfloat16).astype(jnp.float32)
    w_r = w.astype(jnp.bfloat16).astype(jnp.float32)
    ref_bf = _reference(x_r, w_r, b, stride=1, padding=1, dilation=1)
    assert jnp.allclose(out_bf, ref_bf, atol=1e-3, rtol=1e-3), float(
        jnp.max(jnp.abs(out_bf - ref_bf)))

    # ---- config B: default Conv(16, 8) (kernel_size=1, padding=0) ----
    x2 = jax.random.normal(kx2, (2, 16, 16), jnp.float32)
    w2, b2 = make_params(kw2, kb2, 16, 8, 1)
    out2 = jax.block_until_ready(
        conv_forward(x2, w2, b2, stride=1, padding=0, dilation=1))
    ref2 = _reference(x2, w2, b2, stride=1, padding=0, dilation=1)
    assert out2.shape == ref2.shape, (out2.shape, ref2.shape)
    assert jnp.allclose(out2, ref2, atol=1e-5, rtol=1e-5), float(
        jnp.max(jnp.abs(out2 - ref2)))

    # ---- config C: dilated Conv(8, 16, kernel_size=3, dilation=2, padding=2) ----
    out3 = jax.block_until_ready(
        conv_forward(x, w, b, stride=1, padding=2, dilation=2))
    ref3 = _reference(x, w, b, stride=1, padding=2, dilation=2)
    assert out3.shape == ref3.shape, (out3.shape, ref3.shape)
    assert jnp.allclose(out3, ref3, atol=1e-5, rtol=1e-5), float(
        jnp.max(jnp.abs(out3 - ref3)))

    print("KERNEL_OK")
</pallas_src>

<mosaic_0001>
module attributes {stable_mosaic.version = 11 : i64} {
  func.func @_conv1d_kernel(%arg0: i32, %arg1: i32, %arg2: i32, %arg3: memref<1x1x18x128xf32, #tpu.memory_space<vmem>>, %arg4: memref<3x128x128xf32, #tpu.memory_space<vmem>>, %arg5: memref<1x128xf32, #tpu.memory_space<vmem>>, %arg6: memref<1x16x128xf32, #tpu.memory_space<vmem>>, %arg7: memref<16x128xf32, #tpu.memory_space<vmem>>) attributes {dimension_semantics = [#tpu.dimension_semantics<parallel>, #tpu.dimension_semantics<parallel>, #tpu.dimension_semantics<parallel>], iteration_bounds = array<i64: 2, 1, 1>, scalar_prefetch = 0 : i64, scratch_operands = 1 : i64, tpu.core_type = #tpu.core_type<tc>, window_params = [{transform_indices = @transform_0, window_bounds = array<i64: 1, 1, 18, 128>}, {transform_indices = @transform_1, window_bounds = array<i64: 3, 128, 128>}, {transform_indices = @transform_2, window_bounds = array<i64: 1, 128>}, {transform_indices = @transform_3, window_bounds = array<i64: 1, 16, 128>}]} {
    %c0 = arith.constant 0 : index
    %c0_0 = arith.constant 0 : index
    %0 = vector.load %arg5[%c0, %c0_0] : memref<1x128xf32, #tpu.memory_space<vmem>>, vector<1x128xf32>
    %1 = vector.shape_cast %0 : vector<1x128xf32> to vector<1x128xf32>
    %2 = vector.broadcast %1 : vector<1x128xf32> to vector<16x128xf32>
    %c0_1 = arith.constant 0 : index
    %c0_2 = arith.constant 0 : index
    %3 = vector.load %arg7[%c0_1, %c0_2] : memref<16x128xf32, #tpu.memory_space<vmem>>, vector<16x128xf32>
    tpu.vector_store %arg7[%c0_1, %c0_2], %2 {strides = array<i32>} : memref<16x128xf32, #tpu.memory_space<vmem>>, vector<16x128xf32>,
    %c0_3 = arith.constant 0 : index
    %c0_4 = arith.constant 0 : index
    %c0_5 = arith.constant 0 : index
    %c0_6 = arith.constant 0 : index
    %4 = vector.load %arg3[%c0_3, %c0_4, %c0_5, %c0_6] : memref<1x1x18x128xf32, #tpu.memory_space<vmem>>, vector<1x1x16x128xf32>
    %5 = vector.shape_cast %4 : vector<1x1x16x128xf32> to vector<16x128xf32>
    %c0_7 = arith.constant 0 : index
    %c0_8 = arith.constant 0 : index
    %6 = vector.load %arg7[%c0_7, %c0_8] : memref<16x128xf32, #tpu.memory_space<vmem>>, vector<16x128xf32>
    %c0_9 = arith.constant 0 : index
    %c0_10 = arith.constant 0 : index
    %c0_11 = arith.constant 0 : index
    %7 = vector.load %arg4[%c0_9, %c0_10, %c0_11] : memref<3x128x128xf32, #tpu.memory_space<vmem>>, vector<1x128x128xf32>
    %8 = vector.shape_cast %7 : vector<1x128x128xf32> to vector<128x128xf32>
    %cst = arith.constant dense<0.000000e+00> : vector<16x128xf32>
    %9 = tpu.matmul %5, %8, %cst {dimension_numbers = #tpu.dot_dimension_numbers<[1], [0], [0], [1], [0, 0, 1, 1], [], []>} : vector<16x128xf32>, vector<128x128xf32>, vector<16x128xf32> -> vector<16x128xf32>
    %10 = arith.addf %6, %9 : vector<16x128xf32>
    %c0_12 = arith.constant 0 : index
    %c0_13 = arith.constant 0 : index
    %11 = vector.load %arg7[%c0_12, %c0_13] : memref<16x128xf32, #tpu.memory_space<vmem>>, vector<16x128xf32>
    tpu.vector_store %arg7[%c0_12, %c0_13], %10 {strides = array<i32>} : memref<16x128xf32, #tpu.memory_space<vmem>>, vector<16x128xf32>,
    %c0_14 = arith.constant 0 : index
    %c0_15 = arith.constant 0 : index
    %c1 = arith.constant 1 : index
    %c0_16 = arith.constant 0 : index
    %12 = vector.load %arg3[%c0_14, %c0_15, %c1, %c0_16] : memref<1x1x18x128xf32, #tpu.memory_space<vmem>>, vector<1x1x16x128xf32>
    %13 = vector.shape_cast %12 : vector<1x1x16x128xf32> to vector<16x128xf32>
    %c0_17 = arith.constant 0 : index
    %c0_18 = arith.constant 0 : index
    %14 = vector.load %arg7[%c0_17, %c0_18] : memref<16x128xf32, #tpu.memory_space<vmem>>, vector<16x128xf32>
    %c1_19 = arith.constant 1 : index
    %c0_20 = arith.constant 0 : index
    %c0_21 = arith.constant 0 : index
    %15 = vector.load %arg4[%c1_19, %c0_20, %c0_21] : memref<3x128x128xf32, #tpu.memory_space<vmem>>, vector<1x128x128xf32>
    %16 = vector.shape_cast %15 : vector<1x128x128xf32> to vector<128x128xf32>
    %cst_22 = arith.constant dense<0.000000e+00> : vector<16x128xf32>
    %17 = tpu.matmul %13, %16, %cst_22 {dimension_numbers = #tpu.dot_dimension_numbers<[1], [0], [0], [1], [0, 0, 1, 1], [], []>} : vector<16x128xf32>, vector<128x128xf32>, vector<16x128xf32> -> vector<16x128xf32>
    %18 = arith.addf %14, %17 : vector<16x128xf32>
    %c0_23 = arith.constant 0 : index
    %c0_24 = arith.constant 0 : index
    %19 = vector.load %arg7[%c0_23, %c0_24] : memref<16x128xf32, #tpu.memory_space<vmem>>, vector<16x128xf32>
    tpu.vector_store %arg7[%c0_23, %c0_24], %18 {strides = array<i32>} : memref<16x128xf32, #tpu.memory_space<vmem>>, vector<16x128xf32>,
    %c0_25 = arith.constant 0 : index
    %c0_26 = arith.constant 0 : index
    %c2 = arith.constant 2 : index
    %c0_27 = arith.constant 0 : index
    %20 = vector.load %arg3[%c0_25, %c0_26, %c2, %c0_27] : memref<1x1x18x128xf32, #tpu.memory_space<vmem>>, vector<1x1x16x128xf32>
    %21 = vector.shape_cast %20 : vector<1x1x16x128xf32> to vector<16x128xf32>
    %c0_28 = arith.constant 0 : index
    %c0_29 = arith.constant 0 : index
    %22 = vector.load %arg7[%c0_28, %c0_29] : memref<16x128xf32, #tpu.memory_space<vmem>>, vector<16x128xf32>
    %c2_30 = arith.constant 2 : index
    %c0_31 = arith.constant 0 : index
    %c0_32 = arith.constant 0 : index
    %23 = vector.load %arg4[%c2_30, %c0_31, %c0_32] : memref<3x128x128xf32, #tpu.memory_space<vmem>>, vector<1x128x128xf32>
    %24 = vector.shape_cast %23 : vector<1x128x128xf32> to vector<128x128xf32>
    %cst_33 = arith.constant dense<0.000000e+00> : vector<16x128xf32>
    %25 = tpu.matmul %21, %24, %cst_33 {dimension_numbers = #tpu.dot_dimension_numbers<[1], [0], [0], [1], [0, 0, 1, 1], [], []>} : vector<16x128xf32>, vector<128x128xf32>, vector<16x128xf32> -> vector<16x128xf32>
    %26 = arith.addf %22, %25 : vector<16x128xf32>
    %c0_34 = arith.constant 0 : index
    %c0_35 = arith.constant 0 : index
    %27 = vector.load %arg7[%c0_34, %c0_35] : memref<16x128xf32, #tpu.memory_space<vmem>>, vector<16x128xf32>
    tpu.vector_store %arg7[%c0_34, %c0_35], %26 {strides = array<i32>} : memref<16x128xf32, #tpu.memory_space<vmem>>, vector<16x128xf32>,
    %c0_36 = arith.constant 0 : index
    %c0_37 = arith.constant 0 : index
    %28 = vector.load %arg7[%c0_36, %c0_37] : memref<16x128xf32, #tpu.memory_space<vmem>>, vector<16x128xf32>
    %c0_38 = arith.constant 0 : index
    %c0_39 = arith.constant 0 : index
    %c0_40 = arith.constant 0 : index
    %29 = vector.load %arg6[%c0_38, %c0_39, %c0_40] : memref<1x16x128xf32, #tpu.memory_space<vmem>>, vector<1x16x128xf32>
    %30 = vector.shape_cast %29 : vector<1x16x128xf32> to vector<16x128xf32>
    %31 = vector.shape_cast %28 : vector<16x128xf32> to vector<1x16x128xf32>
    tpu.vector_store %arg6[%c0_38, %c0_39, %c0_40], %31 {strides = array<i32>} : memref<1x16x128xf32, #tpu.memory_space<vmem>>, vector<1x16x128xf32>,
    return
  }
  func.func @transform_0(%arg0: i32, %arg1: i32, %arg2: i32) -> (i32, i32, i32, i32) {
    %c0_i32 = arith.constant 0 : i32
    %c0_i32_0 = arith.constant 0 : i32
    %c0_i32_1 = arith.constant 0 : i32
    return %arg0, %arg1, %c0_i32, %c0_i32_0 : i32, i32, i32, i32
  }
  func.func @transform_1(%arg0: i32, %arg1: i32, %arg2: i32) -> (i32, i32, i32) {
    %c0_i32 = arith.constant 0 : i32
    %c0_i32_0 = arith.constant 0 : i32
    %c0_i32_1 = arith.constant 0 : i32
    return %c0_i32, %c0_i32_0, %arg2 : i32, i32, i32
  }
  func.func @transform_2(%arg0: i32, %arg1: i32, %arg2: i32) -> (i32, i32) {
    %c0_i32 = arith.constant 0 : i32
    %c0_i32_0 = arith.constant 0 : i32
    return %c0_i32, %arg2 : i32, i32
  }
  func.func @transform_3(%arg0: i32, %arg1: i32, %arg2: i32) -> (i32, i32, i32) {
    %c0_i32 = arith.constant 0 : i32
    return %arg0, %arg1, %arg2 : i32, i32, i32
  }
}

</mosaic_0001>

<llo_original>
// kernel: tpu_custom_call.1
$region0: #{tpu_custom_call.1}
  #allocation0 [shape = 'u32[]', space=smem, size = 0x4, offset = 0x4, fixed_abs, tag = 'smem constant byte address 0x4 - core index']
  #allocation1 [shape = 'u32[144,128]{1,0:T(1,128)}', space=vmem, size = 0x12000, scoped, tag = 'internal scratch']
  #allocation2 [shape = 'f32[16,128]{1,0:T(8,128)}', space=vmem, size = 0x2000, scoped, tag = 'scratch operand']
  %s0 = inlined_call_operand.vmem [shape: f32[2,1,18,128], index: 0, kind: input, shape index: {}]
  %s1 = inlined_call_operand.hbm [shape: f32[3,128,128], index: 1, kind: input, shape index: {}]
  %s2 = inlined_call_operand.vmem [shape: f32[1,128], index: 2, kind: input, shape index: {}]
  %s3 = inlined_call_operand.hbm [shape: f32[2,16,128], index: 3, kind: output, shape index: {}]
  %s4 = sld [smem:[#allocation0]]
  $region49: #{tpu_custom_call.1} parent=0
    _
  %s6 = ssub.s32 1, %s4
  %s7 = scalar_select 0, %s6, %s4
  $region1: #{tpu_custom_call.1} parent=0
    #allocation3 [shape = 'u8[196608]{0}', space=vmem, size = 0x30000, scoped, tag = 'input window, operand 1, single buffered']
    #allocation4 [shape = 's32[2]{0}', space=sflag, size = 0x8, scoped, tag = 'scoped memory for tpu_custom_call.1']
    #allocation5 [shape = 's32[2]{0}', space=sflag, size = 0x8, scoped, tag = 'scoped memory for tpu_custom_call.1']
    #allocation6 [shape = 'u8[16384]{0}', space=vmem, size = 0x4000, scoped, tag = 'output window, operand 0']
    %8 = vsyncpa [#allocation4], 0
    %9 = vsyncpa [#allocation5], 0
    %s10 = scalar_lea.sflag [#allocation5], 1
    %11 = vsyncpa %s10, 0
    loop: start=0, step=1, limit=4
    $region2: #{tpu_custom_call.1} parent=1 // loop_pre_header
      _
    $region3: #{tpu_custom_call.1} parent=1 // loop_header
      %s13 = sphi 0, %s17
      %p14 = scmp.ge.s32.totalorder %s13, 4
      %s20 = sphi 0, %s39
      %s21 = sphi 0, %s35
      %s22 = sphi 0, %s31
      %s23 = sphi 0, %s20
      %s24 = sphi 0, %s21
      %s25 = sphi 0, %s22
      %s26 = sphi 0, %s23
      %s27 = sphi 0, %s24
      %s28 = sphi 0, %s25
      %s44 = sphi 0, %s46
      %s47 = sphi 0, %s44
      %s48 = sphi 0, %s47
      %s64 = sphi 0, %s48
      %s70 = sphi 0, %s72
      %s73 = sphi 0, %s70
      %s74 = sphi 0, %s73
      %s90 = sphi 0, %s74
      %s96 = sphi 0, %s98
      %s99 = sphi 0, %s96
      %s100 = sphi 0, %s99
      %s116 = sphi 0, %s100
      %s126 = sphi 0, %s128
      %s129 = sphi 0, %s126
      %s130 = sphi 0, %s129
      %s146 = sphi 0, %s130
    $region4: #{tpu_custom_call.1} parent=1 // loop_header_branch
      %16 = sbr.rel (%p14) target = $region8
    $region5: #{tpu_custom_call.1} parent=1 // loop_body
      %s18 = ssub.s32 %s13, 1
      %s19 = ssub.s32 %s13, 2
      %s29 = sadd.s32 1, %s22
      %p30 = scmp.ge.s32.totalorder %s29, 1
      %s31 = scalar_select %p30, 0, %s29
      %s32 = sadd.s32 1, %s21
      %s33 = scalar_select %p30, %s32, %s21
      %p34 = scmp.ge.s32.totalorder %s33, 1
      %s35 = scalar_select %p34, 0, %s33
      %s36 = sadd.s32 1, %s20
      %s37 = scalar_select %p34, %s36, %s20
      %p38 = scmp.ge.s32.totalorder %s37, 2
      %s39 = scalar_select %p38, 0, %s37
      %s40 = ssub.s32 %s20, %s39
      %s41 = ssub.s32 %s21, %s35
      %s42 = sor.u32 %s40, %s41
      %p43 = scmp.eq.s32.totalorder %s42, 0
      %s45 = sadd.s32 %s44, 1
      %s46 = scalar_select %p43, %s44, %s45
      %p49 = pneg %p43
      %p50 = scmp.eq.s32.totalorder %s13, 1
      %p51 = por %p49, %p50
      %p52 = scmp.ne.s32.totalorder %s44, %s47
      %p53 = scmp.eq.s32.totalorder %s13, 0
      %p54 = por %p52, %p53
      %p55 = scmp.ne.s32.totalorder %s44, %s47
      %p56 = scmp.eq.s32.totalorder %s18, 1
      %p57 = por %p55, %p56
      %p58 = scmp.ne.s32.totalorder %s47, %s48
      %p59 = scmp.eq.s32.totalorder %s18, 0
      %p60 = por %p58, %p59
      %p61 = scmp.ne.s32.totalorder %s47, %s48
      %p62 = scmp.eq.s32.totalorder %s19, 1
      %p63 = por %p61, %p62
      %p65 = scmp.ne.s32.totalorder %s48, %s64
      %p66 = scmp.eq.s32.totalorder %s19, 0
      %p67 = por %p65, %p66
      %s68 = ssub.s32 %s22, %s31
      %p69 = scmp.eq.s32.totalorder %s68, 0
      %s71 = sadd.s32 %s70, 1
      %s72 = scalar_select %p69, %s70, %s71
      %p75 = pneg %p69
      %p76 = scmp.eq.s32.totalorder %s13, 1
      %p77 = por %p75, %p76
      %p78 = scmp.ne.s32.totalorder %s70, %s73
      %p79 = scmp.eq.s32.totalorder %s13, 0
      %p80 = por %p78, %p79
      %p81 = scmp.ne.s32.totalorder %s70, %s73
      %p82 = scmp.eq.s32.totalorder %s18, 1
      %p83 = por %p81, %p82
      %p84 = scmp.ne.s32.totalorder %s73, %s74
      %p85 = scmp.eq.s32.totalorder %s18, 0
      %p86 = por %p84, %p85
      %p87 = scmp.ne.s32.totalorder %s73, %s74
      %p88 = scmp.eq.s32.totalorder %s19, 1
      %p89 = por %p87, %p88
      %p91 = scmp.ne.s32.totalorder %s74, %s90
      %p92 = scmp.eq.s32.totalorder %s19, 0
      %p93 = por %p91, %p92
      %s94 = ssub.s32 %s22, %s31
      %p95 = scmp.eq.s32.totalorder %s94, 0
      %s97 = sadd.s32 %s96, 1
      %s98 = scalar_select %p95, %s96, %s97
      %p101 = pneg %p95
      %p102 = scmp.eq.s32.totalorder %s13, 1
      %p103 = por %p101, %p102
      %p104 = scmp.ne.s32.totalorder %s96, %s99
      %p105 = scmp.eq.s32.totalorder %s13, 0
      %p106 = por %p104, %p105
      %p107 = scmp.ne.s32.totalorder %s96, %s99
      %p108 = scmp.eq.s32.totalorder %s18, 1
      %p109 = por %p107, %p108
      %p110 = scmp.ne.s32.totalorder %s99, %s100
      %p111 = scmp.eq.s32.totalorder %s18, 0
      %p112 = por %p110, %p111
      %p113 = scmp.ne.s32.totalorder %s99, %s100
      %p114 = scmp.eq.s32.totalorder %s19, 1
      %p115 = por %p113, %p114
      %p117 = scmp.ne.s32.totalorder %s100, %s116
      %p118 = scmp.eq.s32.totalorder %s19, 0
      %p119 = por %p117, %p118
      %s120 = ssub.s32 %s20, %s39
      %s121 = ssub.s32 %s21, %s35
      %s122 = sor.u32 %s120, %s121
      %s123 = ssub.s32 %s22, %s31
      %s124 = sor.u32 %s122, %s123
      %p125 = scmp.eq.s32.totalorder %s124, 0
      %s127 = sadd.s32 %s126, 1
      %s128 = scalar_select %p125, %s126, %s127
      %p131 = pneg %p125
      %p132 = scmp.eq.s32.totalorder %s13, 1
      %p133 = por %p131, %p132
      %p134 = scmp.ne.s32.totalorder %s126, %s129
      %p135 = scmp.eq.s32.totalorder %s13, 0
      %p136 = por %p134, %p135
      %p137 = scmp.ne.s32.totalorder %s126, %s129
      %p138 = scmp.eq.s32.totalorder %s18, 1
      %p139 = por %p137, %p138
      %p140 = scmp.ne.s32.totalorder %s129, %s130
      %p141 = scmp.eq.s32.totalorder %s18, 0
      %p142 = por %p140, %p141
      %p143 = scmp.ne.s32.totalorder %s129, %s130
      %p144 = scmp.eq.s32.totalorder %s19, 1
      %p145 = por %p143, %p144
      %p147 = scmp.ne.s32.totalorder %s130, %s146
      %p148 = scmp.eq.s32.totalorder %s19, 0
      %p149 = por %p147, %p148
      %p150 = scmp.le.s32.totalorder 1, %s13
      %p151 = scmp.lt.s32.totalorder %s13, 3
      %p152 = pnand %p150, %p151
      %p153 = pneg %p152
      // Predicated region
      $region9: #{tpu_custom_call.1} parent=5 // pred_check
        _
      $region10: #{tpu_custom_call.1} parent=5 // pred_check_branch
        %155 = sbr.rel (%p152) target = $region12
      $region11: #{tpu_custom_call.1} parent=5 // pred_region
        %s156 = ssub.s32 %s13, 1
        // Predicated region
        $region13: #{tpu_custom_call.1} parent=11 // pred_check
          %p157 = pneg %p86
        $region14: #{tpu_custom_call.1} parent=11 // pred_check_branch
          %159 = sbr.rel (%p157) target = $region16
        $region15: #{tpu_custom_call.1} parent=11 // pred_region
          %s161 = ssub.s32 6144, 6144
          %162 = vsyncadd [#allocation4], %s161
          %s163 = smul.addr %s25, 128
          %s164 = scalar_lea.hbm %s1, %s163
          %s165 = sshll.u32 [#allocation3], 4
          %s166 = int_to_ptr.vmem [resolvable:$true] %s165
          %171 = dma.hbm_to_vmem [thread:$0]  %s164, 6144, %s166, [#allocation4], 128, 128, 8
        $region16: #{tpu_custom_call.1} parent=11 // pred_fallthru
          _
        // Predicated region
        $region17: #{tpu_custom_call.1} parent=11 // pred_check
          %p172 = pneg %p112
        $region18: #{tpu_custom_call.1} parent=11 // pred_check_branch
          %174 = sbr.rel (%p172) target = $region20
        $region19: #{tpu_custom_call.1} parent=11 // pred_region
          %p175 = scmp.lt.s32.totalorder %s25, 0
          %s176 = scalar_select %p175, %s25, 0
          %s177 = scalar_lea.vmem %s2, %s176
        $region20: #{tpu_custom_call.1} parent=11 // pred_fallthru
          _
      $region12: #{tpu_custom_call.1} parent=5 // pred_fallthru
        _
      %p178 = scmp.lt.s32.totalorder %s13, 2
      // Predicated region
      $region21: #{tpu_custom_call.1} parent=5 // pred_check
        %p179 = pneg %p178
      $region22: #{tpu_custom_call.1} parent=5 // pred_check_branch
        %181 = sbr.rel (%p179) target = $region24
      $region23: #{tpu_custom_call.1} parent=5 // pred_region
        // Predicated region
        $region25: #{tpu_custom_call.1} parent=23 // pred_check
          %p182 = pneg %p54
        $region26: #{tpu_custom_call.1} parent=23 // pred_check_branch
          %184 = sbr.rel (%p182) target = $region28
        $region27: #{tpu_custom_call.1} parent=23 // pred_region
          %p185 = scmp.lt.s32.totalorder %s20, 1
          %s186 = scalar_select %p185, %s20, 1
          %p187 = scmp.lt.s32.totalorder %s21, 0
          %s188 = scalar_select %p187, %s21, 0
          %s189 = smul.addr %s188, 3
          %s190 = smul.addr %s186, 3
          %s191 = sadd.s32 %s189, %s190
          %s192 = smul.addr %s191, 8
          %s193 = scalar_lea.vmem %s0, %s192
        $region28: #{tpu_custom_call.1} parent=23 // pred_fallthru
          _
      $region24: #{tpu_custom_call.1} parent=5 // pred_fallthru
        _
      %p194 = scmp.le.s32.totalorder 1, %s13
      %p195 = scmp.lt.s32.totalorder %s13, 3
      %p196 = pnand %p194, %p195
      %p197 = pneg %p196
      // Predicated region
      $region29: #{tpu_custom_call.1} parent=5 // pred_check
        _
      $region30: #{tpu_custom_call.1} parent=5 // pred_check_branch
        %199 = sbr.rel (%p196) target = $region32
      $region31: #{tpu_custom_call.1} parent=5 // pred_region
        %s200 = ssub.s32 %s13, 1
        // Predicated region
        $region33: #{tpu_custom_call.1} parent=31 // pred_check
          %p201 = pneg %p86
        $region34: #{tpu_custom_call.1} parent=31 // pred_check_branch
          %203 = sbr.rel (%p201) target = $region36
        $region35: #{tpu_custom_call.1} parent=31 // pred_region
          %204 = dma.done [#allocation4], 6144
        $region36: #{tpu_custom_call.1} parent=31 // pred_fallthru
          _
        %p205 = scmp.lt.s32.totalorder %s23, 1
        %s206 = scalar_select %p205, %s23, 1
        %p207 = scmp.lt.s32.totalorder %s24, 0
        %s208 = scalar_select %p207, %s24, 0
        %s209 = smul.addr %s208, 3
        %s210 = smul.addr %s206, 3
        %s211 = sadd.s32 %s209, %s210
        %s212 = smul.addr %s211, 8
        %s213 = scalar_lea.vmem %s0, %s212
        %p214 = pneg %p60
        %p215 = pneg %p57
        %p216 = pneg %p86
        %p217 = pneg %p83
        %p218 = scmp.lt.s32.totalorder %s25, 0
        %s219 = scalar_select %p218, %s25, 0
        %s220 = scalar_lea.vmem %s2, %s219
        %p221 = pneg %p112
        %p222 = pneg %p109
        %p223 = pneg %p142
        %p224 = pneg %p139
        %s225 = sand.u32 %s129, 1
        %s226 = scalar_lea.sflag [#allocation5], %s225
        %s227 = sand.u32 %s129, 1
        %s228 = smul.addr %s227, 16
        %s229 = scalar_lea.vmem [#allocation6], %s228
        %p230 = scmp.lt.s32.totalorder %s23, 1
        %s231 = scalar_select %p230, %s23, 1
        %p232 = scmp.lt.s32.totalorder %s24, 0
        %s233 = scalar_select %p232, %s24, 0
        %s234 = smul.addr %s233, 3
        %s235 = smul.addr %s231, 3
        %s236 = sadd.s32 %s234, %s235
        %s237 = smul.addr %s236, 8
        %s238 = scalar_lea.vmem %s0, %s237
        %p239 = scmp.lt.s32.totalorder %s25, 0
        %s240 = scalar_select %p239, %s25, 0
        %s241 = scalar_lea.vmem %s2, %s240
        %s242 = smul.u32 2, %s24
        %v243 = vld [vmem:[%s241] sm:$0x1]
        %v245 = vlaneseq
        %v246 = vshrl.u32 %v245, 7
        %v247 = vsub.s32 0, %v246
        %v248 = vrot.slane %v243, %v247
        %250 = vst [vmem:[#allocation2] sm:$0xff] %v248
        %251 = vst [vmem:[#allocation2 + $0x8] sm:$0xff] %v248
        %v252 = vld [vmem:[%s238] sm:$0xff]
        %v253 = vld [vmem:[%s238 + $0x8] sm:$0xff]
        %v254 = vld [vmem:[#allocation2] sm:$0xff]
        %v255 = vld [vmem:[#allocation2 + $0x8] sm:$0xff]
        %v256 = vld [vmem:[#allocation3] sm:$0xff]
        %v257 = vld [vmem:[#allocation3 + $0x8] sm:$0xff]
        %v258 = vld [vmem:[#allocation3 + $0x10] sm:$0xff]
        %v259 = vld [vmem:[#allocation3 + $0x18] sm:$0xff]
        %v260 = vld [vmem:[#allocation3 + $0x20] sm:$0xff]
        %v261 = vld [vmem:[#allocation3 + $0x28] sm:$0xff]
        %v262 = vld [vmem:[#allocation3 + $0x30] sm:$0xff]
        %v263 = vld [vmem:[#allocation3 + $0x38] sm:$0xff]
        %v264 = vld [vmem:[#allocation3 + $0x40] sm:$0xff]
        %v265 = vld [vmem:[#allocation3 + $0x48] sm:$0xff]
        %v266 = vld [vmem:[#allocation3 + $0x50] sm:$0xff]
        %v267 = vld [vmem:[#allocation3 + $0x58] sm:$0xff]
        %v268 = vld [vmem:[#allocation3 + $0x60] sm:$0xff]
        %v269 = vld [vmem:[#allocation3 + $0x68] sm:$0xff]
        %v270 = vld [vmem:[#allocation3 + $0x70] sm:$0xff]
        %v271 = vld [vmem:[#allocation3 + $0x78] sm:$0xff]
        %272 = vmatprep.subr.mxu0 0.0
        %273 = vmatpush1.msra.mxu0 %v256
        %274 = vmatprep.subr.mxu0 0.0
        %275 = vmatpush1.msra.mxu0 %v257
        %276 = vmatprep.subr.mxu0 0.0
        %277 = vmatpush1.msra.mxu0 %v258
        %278 = vmatprep.subr.mxu0 0.0
        %279 = vmatpush1.msra.mxu0 %v259
        %280 = vmatprep.subr.mxu0 0.0
        %281 = vmatpush1.msra.mxu0 %v260
        %282 = vmatprep.subr.mxu0 0.0
        %283 = vmatpush1.msra.mxu0 %v261
        %284 = vmatprep.subr.mxu0 0.0
        %285 = vmatpush1.msra.mxu0 %v262
        %286 = vmatprep.subr.mxu0 0.0
        %287 = vmatpush1.msra.mxu0 %v263
        %288 = vmatprep.subr.mxu0 0.0
        %289 = vmatpush1.msra.mxu0 %v264
        %290 = vmatprep.subr.mxu0 0.0
        %291 = vmatpush1.msra.mxu0 %v265
        %292 = vmatprep.subr.mxu0 0.0
        %293 = vmatpush1.msra.mxu0 %v266
        %294 = vmatprep.subr.mxu0 0.0
        %295 = vmatpush1.msra.mxu0 %v267
        %296 = vmatprep.subr.mxu0 0.0
        %297 = vmatpush1.msra.mxu0 %v268
        %298 = vmatprep.subr.mxu0 0.0
        %299 = vmatpush1.msra.mxu0 %v269
        %300 = vmatprep.subr.mxu0 0.0
        %301 = vmatpush1.msra.mxu0 %v270
        %302 = vmatprep.subr.mxu0 0.0
        %303 = vmatpush1.msra.mxu0 %v271
        %304 = vmatprep.subr.mxu0 0.0
        %305 = vmatpush1.msra.mxu0 0.0
        %306 = vmatprep.subr.mxu0 0.0
        %307 = vmatpush1.msra.mxu0 0.0
        %308 = vmatprep.subr.mxu0 0.0
        %309 = vmatpush1.msra.mxu0 0.0
        %310 = vmatprep.subr.mxu0 0.0
        %311 = vmatpush1.msra.mxu0 0.0
        %312 = vmatprep.subr.mxu0 0.0
        %313 = vmatpush1.msra.mxu0 0.0
        %314 = vmatprep.subr.mxu0 0.0
        %315 = vmatpush1.msra.mxu0 0.0
        %316 = vmatprep.subr.mxu0 0.0
        %317 = vmatpush1.msra.mxu0 0.0
        %318 = vmatprep.subr.mxu0 0.0
        %319 = vmatpush1.msra.mxu0 0.0
        %320 = vmatprep.subr.mxu0 0.0
        %321 = vmatpush1.msra.mxu0 0.0
        %322 = vmatprep.subr.mxu0 0.0
        %323 = vmatpush1.msra.mxu0 0.0
        %324 = vmatprep.subr.mxu0 0.0
        %325 = vmatpush1.msra.mxu0 0.0
        %326 = vmatprep.subr.mxu0 0.0
        %327 = vmatpush1.msra.mxu0 0.0
        %328 = vmatprep.subr.mxu0 0.0
        %329 = vmatpush1.msra.mxu0 0.0
        %330 = vmatprep.subr.mxu0 0.0
        %331 = vmatpush1.msra.mxu0 0.0
        %332 = vmatprep.subr.mxu0 0.0
        %333 = vmatpush1.msra.mxu0 0.0
        %334 = vmatprep.subr.mxu0 0.0
        %335 = vmatpush1.msra.mxu0 0.0
        %336 = vmatprep.mubr.f32.mxu0 0.0
        %337 = vmatmul.mubr.f32.gmra.mrb[0].mxu0 %v252
        %v338 = vpop.f32.mrb[0].mxu0
        %v339 = vadd.f32 0.0, %v338
        %v340 = vpop.f32.mrb[0].mxu0
        %341 = vmatprep.mubr.f32.mxu0 0.0
        %342 = vmatmul.mubr.f32.gmra.mrb[0].mxu0 %v253
        %v343 = vpop.f32.mrb[0].mxu0
        %v344 = vadd.f32 0.0, %v343
        %v345 = vpop.f32.mrb[0].mxu0
        %346 = vdwg.mxu0
        %v347 = vadd.f32 %v254, %v339
        %v348 = vadd.f32 %v255, %v344
        %349 = vst [vmem:[#allocation2] sm:$0xff] %v347
        %350 = vst [vmem:[#allocation2 + $0x8] sm:$0xff] %v348
        %v351 = vld [vmem:[%s238 + $0x1] sm:$0xff]
        %v352 = vld [vmem:[%s238 + $0x9] sm:$0xff]
        %v353 = vld [vmem:[#allocation2] sm:$0xff]
        %v354 = vld [vmem:[#allocation2 + $0x8] sm:$0xff]
        %s355 = scalar_lea.vmem [#allocation3], 128
        %v356 = vld [vmem:[%s355] sm:$0xff]
        %v357 = vld [vmem:[%s355 + $0x8] sm:$0xff]
        %v358 = vld [vmem:[%s355 + $0x10] sm:$0xff]
        %v359 = vld [vmem:[%s355 + $0x18] sm:$0xff]
        %v360 = vld [vmem:[%s355 + $0x20] sm:$0xff]
        %v361 = vld [vmem:[%s355 + $0x28] sm:$0xff]
        %v362 = vld [vmem:[%s355 + $0x30] sm:$0xff]
        %v363 = vld [vmem:[%s355 + $0x38] sm:$0xff]
        %v364 = vld [vmem:[%s355 + $0x40] sm:$0xff]
        %v365 = vld [vmem:[%s355 + $0x48] sm:$0xff]
        %v366 = vld [vmem:[%s355 + $0x50] sm:$0xff]
        %v367 = vld [vmem:[%s355 + $0x58] sm:$0xff]
        %v368 = vld [vmem:[%s355 + $0x60] sm:$0xff]
        %v369 = vld [vmem:[%s355 + $0x68] sm:$0xff]
        %v370 = vld [vmem:[%s355 + $0x70] sm:$0xff]
        %v371 = vld [vmem:[%s355 + $0x78] sm:$0xff]
        %372 = vmatprep.subr.mxu0 0.0
        %373 = vmatpush1.msra.mxu0 %v356
        %374 = vmatprep.subr.mxu0 0.0
        %375 = vmatpush1.msra.mxu0 %v357
        %376 = vmatprep.subr.mxu0 0.0
        %377 = vmatpush1.msra.mxu0 %v358
        %378 = vmatprep.subr.mxu0 0.0
        %379 = vmatpush1.msra.mxu0 %v359
        %380 = vmatprep.subr.mxu0 0.0
        %381 = vmatpush1.msra.mxu0 %v360
        %382 = vmatprep.subr.mxu0 0.0
        %383 = vmatpush1.msra.mxu0 %v361
        %384 = vmatprep.subr.mxu0 0.0
        %385 = vmatpush1.msra.mxu0 %v362
        %386 = vmatprep.subr.mxu0 0.0
        %387 = vmatpush1.msra.mxu0 %v363
        %388 = vmatprep.subr.mxu0 0.0
        %389 = vmatpush1.msra.mxu0 %v364
        %390 = vmatprep.subr.mxu0 0.0
        %391 = vmatpush1.msra.mxu0 %v365
        %392 = vmatprep.subr.mxu0 0.0
        %393 = vmatpush1.msra.mxu0 %v366
        %394 = vmatprep.subr.mxu0 0.0
        %395 = vmatpush1.msra.mxu0 %v367
        %396 = vmatprep.subr.mxu0 0.0
        %397 = vmatpush1.msra.mxu0 %v368
        %398 = vmatprep.subr.mxu0 0.0
        %399 = vmatpush1.msra.mxu0 %v369
        %400 = vmatprep.subr.mxu0 0.0
        %401 = vmatpush1.msra.mxu0 %v370
        %402 = vmatprep.subr.mxu0 0.0
        %403 = vmatpush1.msra.mxu0 %v371
        %404 = vmatprep.subr.mxu0 0.0
        %405 = vmatpush1.msra.mxu0 0.0
        %406 = vmatprep.subr.mxu0 0.0
        %407 = vmatpush1.msra.mxu0 0.0
        %408 = vmatprep.subr.mxu0 0.0
        %409 = vmatpush1.msra.mxu0 0.0
        %410 = vmatprep.subr.mxu0 0.0
        %411 = vmatpush1.msra.mxu0 0.0
        %412 = vmatprep.subr.mxu0 0.0
        %413 = vmatpush1.msra.mxu0 0.0
        %414 = vmatprep.subr.mxu0 0.0
        %415 = vmatpush1.msra.mxu0 0.0
        %416 = vmatprep.subr.mxu0 0.0
        %417 = vmatpush1.msra.mxu0 0.0
        %418 = vmatprep.subr.mxu0 0.0
        %419 = vmatpush1.msra.mxu0 0.0
        %420 = vmatprep.subr.mxu0 0.0
        %421 = vmatpush1.msra.mxu0 0.0
        %422 = vmatprep.subr.mxu0 0.0
        %423 = vmatpush1.msra.mxu0 0.0
        %424 = vmatprep.subr.mxu0 0.0
        %425 = vmatpush1.msra.mxu0 0.0
        %426 = vmatprep.subr.mxu0 0.0
        %427 = vmatpush1.msra.mxu0 0.0
        %428 = vmatprep.subr.mxu0 0.0
        %429 = vmatpush1.msra.mxu0 0.0
        %430 = vmatprep.subr.mxu0 0.0
        %431 = vmatpush1.msra.mxu0 0.0
        %432 = vmatprep.subr.mxu0 0.0
        %433 = vmatpush1.msra.mxu0 0.0
        %434 = vmatprep.subr.mxu0 0.0
        %435 = vmatpush1.msra.mxu0 0.0
        %436 = vmatprep.mubr.f32.mxu0 0.0
        %437 = vmatmul.mubr.f32.gmra.mrb[0].mxu0 %v351
        %v438 = vpop.f32.mrb[0].mxu0
        %v439 = vadd.f32 0.0, %v438
        %v440 = vpop.f32.mrb[0].mxu0
        %441 = vmatprep.mubr.f32.mxu0 0.0
        %442 = vmatmul.mubr.f32.gmra.mrb[0].mxu0 %v352
        %v443 = vpop.f32.mrb[0].mxu0
        %v444 = vadd.f32 0.0, %v443
        %v445 = vpop.f32.mrb[0].mxu0
        %446 = vdwg.mxu0
        %v447 = vadd.f32 %v353, %v439
        %v448 = vadd.f32 %v354, %v444
        %449 = vst [vmem:[#allocation2] sm:$0xff] %v447
        %450 = vst [vmem:[#allocation2 + $0x8] sm:$0xff] %v448
        %v451 = vld [vmem:[%s238 + $0x2] sm:$0xff]
        %v452 = vld [vmem:[%s238 + $0xa] sm:$0xff]
        %v453 = vld [vmem:[#allocation2] sm:$0xff]
        %v454 = vld [vmem:[#allocation2 + $0x8] sm:$0xff]
        %s455 = scalar_lea.vmem [#allocation3], 256
        %v456 = vld [vmem:[%s455] sm:$0xff]
        %v457 = vld [vmem:[%s455 + $0x8] sm:$0xff]
        %v458 = vld [vmem:[%s455 + $0x10] sm:$0xff]
        %v459 = vld [vmem:[%s455 + $0x18] sm:$0xff]
        %v460 = vld [vmem:[%s455 + $0x20] sm:$0xff]
        %v461 = vld [vmem:[%s455 + $0x28] sm:$0xff]
        %v462 = vld [vmem:[%s455 + $0x30] sm:$0xff]
        %v463 = vld [vmem:[%s455 + $0x38] sm:$0xff]
        %v464 = vld [vmem:[%s455 + $0x40] sm:$0xff]
        %v465 = vld [vmem:[%s455 + $0x48] sm:$0xff]
        %v466 = vld [vmem:[%s455 + $0x50] sm:$0xff]
        %v467 = vld [vmem:[%s455 + $0x58] sm:$0xff]
        %v468 = vld [vmem:[%s455 + $0x60] sm:$0xff]
        %v469 = vld [vmem:[%s455 + $0x68] sm:$0xff]
        %v470 = vld [vmem:[%s455 + $0x70] sm:$0xff]
        %v471 = vld [vmem:[%s455 + $0x78] sm:$0xff]
        %472 = vmatprep.subr.mxu0 0.0
        %473 = vmatpush1.msra.mxu0 %v456
        %474 = vmatprep.subr.mxu0 0.0
        %475 = vmatpush1.msra.mxu0 %v457
        %476 = vmatprep.subr.mxu0 0.0
        %477 = vmatpush1.msra.mxu0 %v458
        %478 = vmatprep.subr.mxu0 0.0
        %479 = vmatpush1.msra.mxu0 %v459
        %480 = vmatprep.subr.mxu0 0.0
        %481 = vmatpush1.msra.mxu0 %v460
        %482 = vmatprep.subr.mxu0 0.0
        %483 = vmatpush1.msra.mxu0 %v461
        %484 = vmatprep.subr.mxu0 0.0
        %485 = vmatpush1.msra.mxu0 %v462
        %486 = vmatprep.subr.mxu0 0.0
        %487 = vmatpush1.msra.mxu0 %v463
        %488 = vmatprep.subr.mxu0 0.0
        %489 = vmatpush1.msra.mxu0 %v464
        %490 = vmatprep.subr.mxu0 0.0
        %491 = vmatpush1.msra.mxu0 %v465
        %492 = vmatprep.subr.mxu0 0.0
        %493 = vmatpush1.msra.mxu0 %v466
        %494 = vmatprep.subr.mxu0 0.0
        %495 = vmatpush1.msra.mxu0 %v467
        %496 = vmatprep.subr.mxu0 0.0
        %497 = vmatpush1.msra.mxu0 %v468
        %498 = vmatprep.subr.mxu0 0.0
        %499 = vmatpush1.msra.mxu0 %v469
        %500 = vmatprep.subr.mxu0 0.0
        %501 = vmatpush1.msra.mxu0 %v470
        %502 = vmatprep.subr.mxu0 0.0
        %503 = vmatpush1.msra.mxu0 %v471
        %504 = vmatprep.subr.mxu0 0.0
        %505 = vmatpush1.msra.mxu0 0.0
        %506 = vmatprep.subr.mxu0 0.0
        %507 = vmatpush1.msra.mxu0 0.0
        %508 = vmatprep.subr.mxu0 0.0
        %509 = vmatpush1.msra.mxu0 0.0
        %510 = vmatprep.subr.mxu0 0.0
        %511 = vmatpush1.msra.mxu0 0.0
        %512 = vmatprep.subr.mxu0 0.0
        %513 = vmatpush1.msra.mxu0 0.0
        %514 = vmatprep.subr.mxu0 0.0
        %515 = vmatpush1.msra.mxu0 0.0
        %516 = vmatprep.subr.mxu0 0.0
        %517 = vmatpush1.msra.mxu0 0.0
        %518 = vmatprep.subr.mxu0 0.0
        %519 = vmatpush1.msra.mxu0 0.0
        %520 = vmatprep.subr.mxu0 0.0
        %521 = vmatpush1.msra.mxu0 0.0
        %522 = vmatprep.subr.mxu0 0.0
        %523 = vmatpush1.msra.mxu0 0.0
        %524 = vmatprep.subr.mxu0 0.0
        %525 = vmatpush1.msra.mxu0 0.0
        %526 = vmatprep.subr.mxu0 0.0
        %527 = vmatpush1.msra.mxu0 0.0
        %528 = vmatprep.subr.mxu0 0.0
        %529 = vmatpush1.msra.mxu0 0.0
        %530 = vmatprep.subr.mxu0 0.0
        %531 = vmatpush1.msra.mxu0 0.0
        %532 = vmatprep.subr.mxu0 0.0
        %533 = vmatpush1.msra.mxu0 0.0
        %534 = vmatprep.subr.mxu0 0.0
        %535 = vmatpush1.msra.mxu0 0.0
        %536 = vmatprep.mubr.f32.mxu0 0.0
        %537 = vmatmul.mubr.f32.gmra.mrb[0].mxu0 %v451
        %v538 = vpop.f32.mrb[0].mxu0
        %v539 = vadd.f32 0.0, %v538
        %v540 = vpop.f32.mrb[0].mxu0
        %541 = vmatprep.mubr.f32.mxu0 0.0
        %542 = vmatmul.mubr.f32.gmra.mrb[0].mxu0 %v452
        %v543 = vpop.f32.mrb[0].mxu0
        %v544 = vadd.f32 0.0, %v543
        %v545 = vpop.f32.mrb[0].mxu0
        %546 = vdwg.mxu0
        %v547 = vadd.f32 %v453, %v539
        %v548 = vadd.f32 %v454, %v544
        %549 = vst [vmem:[#allocation2] sm:$0xff] %v547
        %550 = vst [vmem:[#allocation2 + $0x8] sm:$0xff] %v548
        %v551 = vld [vmem:[#allocation2] sm:$0xff]
        %v552 = vld [vmem:[#allocation2 + $0x8] sm:$0xff]
        %553 = vst [vmem:[%s229] sm:$0xff] %v551
        %554 = vst [vmem:[%s229 + $0x8] sm:$0xff] %v552
        %s555 = sand.u32 %s129, 1
        %s556 = scalar_lea.sflag [#allocation5], %s555
        %s557 = sand.u32 %s129, 1
        %s558 = smul.addr %s557, 16
        %s559 = scalar_lea.vmem [#allocation6], %s558
        // Predicated region
        $region37: #{tpu_custom_call.1} parent=31 // pred_check
          %p560 = pneg %p139
        $region38: #{tpu_custom_call.1} parent=31 // pred_check_branch
          %562 = sbr.rel (%p560) target = $region40
        $region39: #{tpu_custom_call.1} parent=31 // pred_region
          %s563 = smul.u32 2, %s24
          %s565 = ssub.s32 256, 256
          %566 = vsyncadd %s556, %s565
          %s567 = sadd.s32 %s25, %s563
          %s568 = smul.addr %s23, 2
          %s569 = sadd.s32 %s567, %s568
          %s570 = smul.addr %s569, 128
          %s571 = scalar_lea.hbm %s3, %s570
          %s572 = sshll.u32 %s559, 4
          %s573 = int_to_ptr.vmem [resolvable:$true] %s572
          %578 = dma.vmem_to_hbm [thread:$0]  %s573, 256, %s571, %s556, 128, 128, 8
        $region40: #{tpu_custom_call.1} parent=31 // pred_fallthru
          _
      $region32: #{tpu_custom_call.1} parent=5 // pred_fallthru
        _
      %p579 = scmp.le.s32.totalorder 2, %s13
      // Predicated region
      $region41: #{tpu_custom_call.1} parent=5 // pred_check
        %p580 = pneg %p579
      $region42: #{tpu_custom_call.1} parent=5 // pred_check_branch
        %582 = sbr.rel (%p580) target = $region44
      $region43: #{tpu_custom_call.1} parent=5 // pred_region
        %s583 = ssub.s32 %s13, 2
        // Predicated region
        $region45: #{tpu_custom_call.1} parent=43 // pred_check
          %p584 = pneg %p145
        $region46: #{tpu_custom_call.1} parent=43 // pred_check_branch
          %586 = sbr.rel (%p584) target = $region48
        $region47: #{tpu_custom_call.1} parent=43 // pred_region
          %s587 = sand.u32 %s130, 1
          %s588 = scalar_lea.sflag [#allocation5], %s587
          %s589 = sand.u32 %s130, 1
          %s590 = smul.addr %s589, 16
          %s591 = scalar_lea.vmem [#allocation6], %s590
          %592 = dma.done %s588, 256
        $region48: #{tpu_custom_call.1} parent=43 // pred_fallthru
          _
      $region44: #{tpu_custom_call.1} parent=5 // pred_fallthru
        _
    $region6: #{tpu_custom_call.1} parent=1 // loop_footer
      %s17 = sadd.s32 1, %s13
    $region7: #{tpu_custom_call.1} parent=1 // loop_footer_branch
      %12 = sbr.rel target = $region3
    $region8: #{tpu_custom_call.1} parent=1 // loop_exit
      _
    %593 = vsyncpa [#allocation4], 1
    %s594 = scalar_lea.sflag [#allocation4], 1
    %595 = vsyncpa %s594, 1
    %596 = vsyncpa [#allocation5], 1
    %s597 = scalar_lea.sflag [#allocation5], 1
    %598 = vsyncpa %s597, 1

</llo_original>
